<compile_context>
chip_gen: v6e
topology: v6e:2x2x1
jax: 0.10.0
libtpu: 0.0.40
codegen_flags: <defaults>
</compile_context>

<pallas_src>
import jax
import jax.numpy as jnp
from jax.experimental import pallas as pl
from jax.experimental.pallas import tpu as pltpu


def _attention_aggregator_kernel(b_ref, gamma_ref, emb_ref, td_ref, w_ref, out_ref):
    # Blocks per grid step:
    #   emb_ref  : (TILE_B, N, D)  embeddings (input dtype: f32 or bf16) -- never upcast
    #   td_ref   : (TILE_B, N)     time diffs (f32)
    #   w_ref    : (D, 1)          attention weight column (f32, resident in VMEM)
    #   b_ref    : (1,)            attention bias   (f32, SMEM scalar prefetch)
    #   gamma_ref: (1,)            decay gamma      (f32, SMEM scalar prefetch)
    #   out_ref  : (TILE_B, D)     aggregated embeddings (lane-dense slab)
    tb, n, d = emb_ref.shape
    emb = emb_ref[...]                                            # (TB, N, D), input dtype
    td = td_ref[...]                                              # (TB, N) f32
    bias = b_ref[0]                                               # scalar (SMEM)
    gamma = gamma_ref[0]                                          # scalar (SMEM)

    # valid_mask = (time_diffs != -1)
    valid = (td != -1.0).astype(jnp.float32)                      # (TB, N)

    # ---- attention scores on the MXU: (TB*N, D) x (D, 1) -> (TB, N) f32 ----
    w_col = w_ref[...].astype(emb.dtype)                          # (D, 1)
    scores = jnp.dot(emb.reshape(tb * n, d), w_col,
                     preferred_element_type=jnp.float32)          # (TB*N, 1)
    scores = scores.reshape(tb, n) + bias                         # (TB, N)

    # ---- numerically-stable softmax over documents (denominator kept as z) ----
    m = jnp.max(scores, axis=1, keepdims=True)                    # (TB, 1)
    e = jnp.exp(scores - m)                                       # (TB, N)
    z = jnp.sum(e, axis=1, keepdims=True)                         # (TB, 1) softmax denom

    # decay_factor = exp(-clamp(time_diffs, min=0) * gamma); combined weights.
    decay = jnp.exp(-jnp.maximum(td, 0.0) * gamma)                # (TB, N)
    cw = e * decay * valid                                        # (TB, N)  (= softmax*decay*valid * z)

    # PyTorch:  (e/z * decay * valid) / max(sum(e/z * decay * valid), 1e-8)
    #        ==  cw / max(sum(cw), 1e-8 * z)        -> one reciprocal, exact semantics.
    denom = jnp.maximum(jnp.sum(cw, axis=1, keepdims=True), 1e-8 * z)   # (TB, 1)
    cw = cw * pl.reciprocal(denom, approx=True)                   # (TB, N)

    # ---- aggregation on the MXU: (TB,1,N) x (TB,N,D) -> (TB,1,D) f32 ----
    out = jnp.einsum('bkn,bnd->bkd',
                     cw[:, None, :].astype(emb.dtype), emb,
                     preferred_element_type=jnp.float32)          # (TB, 1, D)
    out_ref[...] = out.reshape(tb, d).astype(out_ref.dtype)


def _default_vmem_limit_bytes():
    """Generation-aware scoped-VMEM limit: ~75% of physical VMEM, capped at 96 MiB.
    v5e/v6e (128 MiB physical) -> 96 MiB; v7x (64 MiB physical) -> 48 MiB."""
    phys = None
    try:
        phys = int(getattr(pltpu.get_tpu_info(), "vmem_capacity_bytes", 0) or 0)
    except Exception:
        phys = None
    if not phys or phys <= 0:
        phys = 64 << 20                      # conservative fallback: smallest (v7x) VMEM
    return min(phys * 3 // 4, 96 << 20)


def _pick_tile_b(batch, num_docs, dim, emb_itemsize, vmem_limit_bytes):
    """Largest batch tile whose *real* VMEM footprint fits under the scoped limit."""
    # Packed-sublane granularity: f32 -> 8 rows, bf16 -> 16, int8/fp8 -> 32.
    align = 8 * max(1, 4 // max(1, emb_itemsize))

    # Real per-batch-row footprint (bytes):
    #   2x double-buffered embeddings block (dominant)
    # + 2x double-buffered time_diffs block (f32) + 2x double-buffered out block
    # + f32 (N,)-sized intermediates (scores / exp / decay / weights, ~6 arrays)
    # + f32 (D,)-sized accumulator row
    # + lane-padded MXU temporaries: the (1, N) weight row fed to the batched matmul
    #   and the (N, 1) score column (each padded to (8, 128)-tiled vregs).
    padded_n = -(-num_docs // 128) * 128
    emb_row = num_docs * dim * emb_itemsize
    td_row = num_docs * 4
    out_row = dim * emb_itemsize
    interm_row = 6 * num_docs * 4 + 2 * dim * 4
    mxu_pad_row = 8 * padded_n * 4 + num_docs * 512
    per_row = 2 * emb_row + 2 * td_row + 2 * out_row + interm_row + mxu_pad_row

    budget = int(vmem_limit_bytes * 0.6)         # headroom for Mosaic internal scratch
    tile = max(1, budget // max(per_row, 1))

    # Keep >= 2 grid steps when the batch allows an aligned split, so both v7x
    # TensorCores get work through the "parallel" grid axis.
    if batch > align:
        half = max(align, ((-(-batch // 2)) // align) * align)
        tile = min(tile, half)

    if tile >= batch:
        return batch
    return max(align, (tile // align) * align)


def attention_aggregator(embeddings, params, time_diffs=None, *, vmem_limit_bytes=None):
    """Pallas equivalent of AttentionAggregator.forward
    (use_attention=True, use_time_weighting=True, num_documents > 1)."""
    if embeddings.ndim == 2:
        # forward() returns 2-D inputs unchanged
        return embeddings

    B, N, D = embeddings.shape
    if time_diffs is None:
        # time_diffs == 0 -> valid_mask = 1 and decay = exp(0) = 1, matching the
        # PyTorch time_diffs=None behaviour.
        time_diffs = jnp.zeros((B, N), dtype=jnp.float32)

    # TODO(synk): if production embedding_dim < 128, pad D to a multiple of 128 (or
    # fold documents into the lane axis) so vregs/VMEM tiles and output stores are
    # lane-dense; with tiny D every (…, D) tile wastes most of its 128 lanes.
    # TODO(synk): for very large N*D per batch row (tile_b clamping down to the
    # alignment), add a second "arbitrary" grid axis over documents with
    # online-softmax running max/sum scratch instead of this single batch-axis grid.

    td = time_diffs.astype(jnp.float32).reshape(B, N)
    w = params["w"].reshape(D, 1).astype(jnp.float32)     # (D, 1) column for the MXU
    b = params["b"].reshape(1).astype(jnp.float32)
    gamma = params["gamma"].reshape(1).astype(jnp.float32)

    if vmem_limit_bytes is None:
        vmem_limit_bytes = _default_vmem_limit_bytes()
    itemsize = jnp.dtype(embeddings.dtype).itemsize
    tile_b = _pick_tile_b(B, N, D, itemsize, vmem_limit_bytes)
    grid = (pl.cdiv(B, tile_b),)

    out = pl.pallas_call(
        _attention_aggregator_kernel,
        out_shape=jax.ShapeDtypeStruct((B, D), embeddings.dtype),
        grid_spec=pltpu.PrefetchScalarGridSpec(
            num_scalar_prefetch=2,                        # bias, gamma -> SMEM
            grid=grid,
            in_specs=[
                pl.BlockSpec((tile_b, N, D), lambda i, b_s, g_s: (i, 0, 0)),  # embeddings
                pl.BlockSpec((tile_b, N), lambda i, b_s, g_s: (i, 0)),        # time_diffs
                pl.BlockSpec((D, 1), lambda i, b_s, g_s: (0, 0)),             # attn weight
            ],
            out_specs=pl.BlockSpec((tile_b, D), lambda i, b_s, g_s: (i, 0)),
        ),
        compiler_params=pltpu.CompilerParams(
            dimension_semantics=("parallel",),
            vmem_limit_bytes=int(vmem_limit_bytes),
        ),
    )(b, gamma, embeddings, td, w)
    return out


def _ref_forward(embeddings, time_diffs, w, b, gamma):
    """Pure-JAX reference mirroring the PyTorch forward (full f32, no MXU)."""
    valid = (time_diffs != -1.0).astype(jnp.float32)[..., None]               # (B, N, 1)
    scores = jnp.sum(embeddings * w.reshape(1, 1, -1), axis=-1, keepdims=True) + b.reshape(1,)
    attn = jax.nn.softmax(scores, axis=1)
    decay = jnp.exp(-jnp.maximum(time_diffs, 0.0) * gamma[0])[..., None]      # (B, N, 1)
    cw = attn * decay * valid
    cw = cw / jnp.maximum(jnp.sum(cw, axis=1, keepdims=True), 1e-8)
    return jnp.sum(embeddings * cw, axis=1)


if __name__ == "__main__":
    key = jax.random.PRNGKey(0)
    B, N, D = 16, 8, 128     # batch, num_documents, embedding_dim (lane-dense D)

    k1, k2, k3, k4 = jax.random.split(key, 4)
    embeddings = jax.random.normal(k1, (B, N, D), dtype=jnp.float32)
    # Non-negative time diffs, with a couple of -1 "invalid" markers.
    time_diffs = jax.random.uniform(k2, (B, N), minval=0.0, maxval=5.0)
    time_diffs = time_diffs.at[0, 3].set(-1.0).at[1, 6].set(-1.0)

    # Deterministic parameter init (shapes from nn.Linear(D, 1) and gamma=0.1).
    w = jax.random.normal(k3, (1, D), dtype=jnp.float32) * 0.1
    b = jax.random.normal(k4, (1,), dtype=jnp.float32) * 0.1
    gamma = jnp.array([0.1], dtype=jnp.float32)
    params = {"w": w, "b": b, "gamma": gamma}

    out = attention_aggregator(embeddings, params, time_diffs)
    out = jax.block_until_ready(out)

    ref = _ref_forward(embeddings, time_diffs, w, b, gamma)
    assert out.shape == (B, D)
    # Tolerance covers the MXU pass-decomposition of f32 matmuls (precision may be
    # below exact f32 at default matmul precision) and the approx EUP reciprocal.
    assert jnp.allclose(out, ref, atol=1e-2, rtol=1e-2), "mismatch vs reference"
    print("KERNEL_OK")
</pallas_src>

<mosaic_0001>
module attributes {stable_mosaic.version = 11 : i64} {
  func.func @_attention_aggregator_kernel(%arg0: i32, %arg1: memref<1xf32, #tpu.memory_space<smem>>, %arg2: memref<1xf32, #tpu.memory_space<smem>>, %arg3: memref<8x8x128xf32, #tpu.memory_space<vmem>>, %arg4: memref<8x8xf32, #tpu.memory_space<vmem>>, %arg5: memref<128x1xf32, #tpu.memory_space<vmem>>, %arg6: memref<8x128xf32, #tpu.memory_space<vmem>>) attributes {dimension_semantics = [#tpu.dimension_semantics<parallel>], iteration_bounds = array<i64: 2>, scalar_prefetch = 2 : i64, scratch_operands = 0 : i64, tpu.core_type = #tpu.core_type<tc>, window_params = [{transform_indices = @transform_0, window_bounds = array<i64: 8, 8, 128>}, {transform_indices = @transform_1, window_bounds = array<i64: 8, 8>}, {pipeline_mode = #tpu.pipeline_mode<synchronous>, transform_indices = @transform_2, window_bounds = array<i64: 128, 1>}, {transform_indices = @transform_3, window_bounds = array<i64: 8, 128>}]} {
    %c0 = arith.constant 0 : index
    %c0_0 = arith.constant 0 : index
    %c0_1 = arith.constant 0 : index
    %0 = vector.load %arg3[%c0, %c0_0, %c0_1] : memref<8x8x128xf32, #tpu.memory_space<vmem>>, vector<8x8x128xf32>
    %c0_2 = arith.constant 0 : index
    %c0_3 = arith.constant 0 : index
    %1 = vector.load %arg4[%c0_2, %c0_3] : memref<8x8xf32, #tpu.memory_space<vmem>>, vector<8x8xf32>
    %c0_4 = arith.constant 0 : index
    %2 = memref.load %arg1[%c0_4] : memref<1xf32, #tpu.memory_space<smem>>
    %c0_5 = arith.constant 0 : index
    %3 = memref.load %arg2[%c0_5] : memref<1xf32, #tpu.memory_space<smem>>
    %cst = arith.constant -1.000000e+00 : f32
    %4 = vector.broadcast %cst : f32 to vector<8x8xf32>
    %5 = arith.cmpf one, %1, %4 : vector<8x8xf32>
    %6 = arith.extui %5 : vector<8x8xi1> to vector<8x8xi32>
    %7 = arith.sitofp %6 : vector<8x8xi32> to vector<8x8xf32>
    %c0_6 = arith.constant 0 : index
    %c0_7 = arith.constant 0 : index
    %8 = vector.load %arg5[%c0_6, %c0_7] : memref<128x1xf32, #tpu.memory_space<vmem>>, vector<128x1xf32>
    %9 = vector.shape_cast %0 : vector<8x8x128xf32> to vector<64x128xf32>
    %cst_8 = arith.constant dense<0.000000e+00> : vector<64x1xf32>
    %10 = tpu.matmul %9, %8, %cst_8 {dimension_numbers = #tpu.dot_dimension_numbers<[1], [0], [0], [1], [0, 0, 1, 1], [], []>} : vector<64x128xf32>, vector<128x1xf32>, vector<64x1xf32> -> vector<64x1xf32>
    %11 = vector.shape_cast %10 : vector<64x1xf32> to vector<8x8xf32>
    %12 = vector.broadcast %2 : f32 to vector<8x8xf32>
    %13 = arith.addf %11, %12 : vector<8x8xf32>
    %cst_9 = arith.constant dense<0xFF800000> : vector<8xf32>
    %14 = vector.multi_reduction <maximumf>, %13, %cst_9 [1] : vector<8x8xf32> to vector<8xf32>
    %15 = vector.shape_cast %14 : vector<8xf32> to vector<8x1xf32>
    %16 = vector.broadcast %15 : vector<8x1xf32> to vector<8x8xf32>
    %17 = arith.subf %13, %16 : vector<8x8xf32>
    %18 = math.exp %17 : vector<8x8xf32>
    %cst_10 = arith.constant dense<0.000000e+00> : vector<8xf32>
    %19 = vector.multi_reduction <add>, %18, %cst_10 [1] : vector<8x8xf32> to vector<8xf32>
    %20 = vector.shape_cast %19 : vector<8xf32> to vector<8x1xf32>
    %cst_11 = arith.constant 0.000000e+00 : f32
    %21 = vector.broadcast %cst_11 : f32 to vector<8x8xf32>
    %22 = arith.maximumf %1, %21 : vector<8x8xf32>
    %cst_12 = arith.constant 0.000000e+00 : f32
    %23 = vector.broadcast %cst_12 : f32 to vector<8x8xf32>
    %24 = arith.subf %23, %22 : vector<8x8xf32>
    %25 = vector.broadcast %3 : f32 to vector<8x8xf32>
    %26 = arith.mulf %24, %25 : vector<8x8xf32>
    %27 = math.exp %26 : vector<8x8xf32>
    %28 = arith.mulf %18, %27 : vector<8x8xf32>
    %29 = arith.mulf %28, %7 : vector<8x8xf32>
    %cst_13 = arith.constant dense<0.000000e+00> : vector<8xf32>
    %30 = vector.multi_reduction <add>, %29, %cst_13 [1] : vector<8x8xf32> to vector<8xf32>
    %31 = vector.shape_cast %30 : vector<8xf32> to vector<8x1xf32>
    %cst_14 = arith.constant 9.99999993E-9 : f32
    %32 = vector.broadcast %cst_14 : f32 to vector<8x1xf32>
    %33 = arith.mulf %32, %20 : vector<8x1xf32>
    %34 = arith.maximumf %31, %33 : vector<8x1xf32>
    %35 = tpu.reciprocal %34 {approx = true} : vector<8x1xf32> -> vector<8x1xf32>
    %36 = vector.broadcast %35 : vector<8x1xf32> to vector<8x8xf32>
    %37 = arith.mulf %29, %36 : vector<8x8xf32>
    %38 = vector.shape_cast %37 : vector<8x8xf32> to vector<8x1x8xf32>
    "tpu.trace_start"() <{level = 10 : i32, message = "bkn,bnd->bkd"}> : () -> ()
    %cst_15 = arith.constant dense<0.000000e+00> : vector<8x1x128xf32>
    %39 = tpu.matmul %38, %0, %cst_15 {dimension_numbers = #tpu.dot_dimension_numbers<[2], [1], [1], [2], [0, 0, 0, 1, 1, 2], [0], [0]>} : vector<8x1x8xf32>, vector<8x8x128xf32>, vector<8x1x128xf32> -> vector<8x1x128xf32>
    "tpu.trace_stop"() : () -> ()
    %40 = vector.shape_cast %39 : vector<8x1x128xf32> to vector<8x128xf32>
    %c0_16 = arith.constant 0 : index
    %c0_17 = arith.constant 0 : index
    %41 = vector.load %arg6[%c0_16, %c0_17] : memref<8x128xf32, #tpu.memory_space<vmem>>, vector<8x128xf32>
    tpu.vector_store %arg6[%c0_16, %c0_17], %40 {strides = array<i32>} : memref<8x128xf32, #tpu.memory_space<vmem>>, vector<8x128xf32>,
    return
  }
  func.func @transform_0(%arg0: i32, %arg1: memref<1xf32, #tpu.memory_space<smem>>, %arg2: memref<1xf32, #tpu.memory_space<smem>>) -> (i32, i32, i32) {
    %c0_i32 = arith.constant 0 : i32
    %c0_i32_0 = arith.constant 0 : i32
    %c0_i32_1 = arith.constant 0 : i32
    return %arg0, %c0_i32, %c0_i32_0 : i32, i32, i32
  }
  func.func @transform_1(%arg0: i32, %arg1: memref<1xf32, #tpu.memory_space<smem>>, %arg2: memref<1xf32, #tpu.memory_space<smem>>) -> (i32, i32) {
    %c0_i32 = arith.constant 0 : i32
    %c0_i32_0 = arith.constant 0 : i32
    return %arg0, %c0_i32 : i32, i32
  }
  func.func @transform_2(%arg0: i32, %arg1: memref<1xf32, #tpu.memory_space<smem>>, %arg2: memref<1xf32, #tpu.memory_space<smem>>) -> (i32, i32) {
    %c0_i32 = arith.constant 0 : i32
    %c0_i32_0 = arith.constant 0 : i32
    %c0_i32_1 = arith.constant 0 : i32
    return %c0_i32, %c0_i32_0 : i32, i32
  }
  func.func @transform_3(%arg0: i32, %arg1: memref<1xf32, #tpu.memory_space<smem>>, %arg2: memref<1xf32, #tpu.memory_space<smem>>) -> (i32, i32) {
    %c0_i32 = arith.constant 0 : i32
    %c0_i32_0 = arith.constant 0 : i32
    return %arg0, %c0_i32 : i32, i32
  }
}

</mosaic_0001>

<llo_original>
// kernel: tpu_custom_call.1
$region0: #{tpu_custom_call.1}
  #allocation0 [shape = 'u32[]', space=smem, size = 0x4, offset = 0x4, fixed_abs, tag = 'smem constant byte address 0x4 - core index']
  #allocation1 [shape = 'u32[144,128]{1,0:T(1,128)}', space=vmem, size = 0x12000, scoped, tag = 'internal scratch']
  #allocation2 [shape = 's32[1]{0}', space=sflag, size = 0x4, scoped, tag = 'scoped memory for tpu_custom_call.1']
  #allocation3 [shape = 'f32[1]{0:T(128)S(6)}', space=smem, size = 0x200, scoped, tag = 'prefetched SMEM operand 0']
  #allocation4 [shape = 'f32[1]{0:T(128)S(6)}', space=smem, size = 0x200, scoped, tag = 'prefetched SMEM operand 1']
  %s0 = inlined_call_operand.<no memory space> [shape: f32[1], index: 0, kind: input, shape index: {}]
  %s1 = inlined_call_operand.<no memory space> [shape: f32[1], index: 1, kind: input, shape index: {}]
  %s2 = inlined_call_operand.vmem [shape: f32[16,8,128], index: 2, kind: input, shape index: {}]
  %s3 = inlined_call_operand.vmem [shape: f32[16,8], index: 3, kind: input, shape index: {}]
  %s4 = inlined_call_operand.vmem [shape: f32[128,1], index: 4, kind: input, shape index: {}]
  %s5 = inlined_call_operand.hbm [shape: f32[16,128], index: 5, kind: output, shape index: {}]
  %s6 = sld [smem:[#allocation0]]
  $region45: #{tpu_custom_call.1} parent=0
    _
  %s8 = ssub.s32 1, %s6
  %s9 = scalar_select 0, %s8, %s6
  %10 = sst [smem:[#allocation3]] %s0
  %11 = sst [smem:[#allocation4]] %s1
  $region1: #{tpu_custom_call.1} parent=0
    #allocation5 [shape = 'u8[8192]{0}', space=vmem, size = 0x2000, scoped, tag = 'output window, operand 0']
    #allocation6 [shape = 's32[2]{0}', space=sflag, size = 0x8, scoped, tag = 'scoped memory for tpu_custom_call.1']
    %12 = vsyncpa [#allocation6], 0
    %s13 = scalar_lea.sflag [#allocation6], 1
    %14 = vsyncpa %s13, 0
    loop: start=0, step=1, limit=4
    $region2: #{tpu_custom_call.1} parent=1 // loop_pre_header
      _
    $region3: #{tpu_custom_call.1} parent=1 // loop_header
      %s16 = sphi 0, %s20
      %p17 = scmp.ge.s32.totalorder %s16, 4
      %s26 = sphi 0, %s28
      %s29 = sphi 0, %s26
      %s30 = sphi 0, %s29
      %s46 = sphi 0, %s30
      %s52 = sphi 0, %s54
      %s55 = sphi 0, %s52
      %s56 = sphi 0, %s55
      %s72 = sphi 0, %s56
      %s76 = sphi 0, %s76
      %s78 = sphi 0, %s76
      %s79 = sphi 0, %s78
      %s93 = sphi 0, %s79
      %s99 = sphi 0, %s101
      %s102 = sphi 0, %s99
      %s103 = sphi 0, %s102
      %s119 = sphi 0, %s103
    $region4: #{tpu_custom_call.1} parent=1 // loop_header_branch
      %19 = sbr.rel (%p17) target = $region8
    $region5: #{tpu_custom_call.1} parent=1 // loop_body
      %s21 = ssub.s32 %s16, 1
      %s22 = ssub.s32 %s16, 2
      %s23 = sadd.s32 %s16, 1
      %s24 = ssub.s32 %s16, %s23
      %p25 = scmp.eq.s32.totalorder %s24, 0
      %s27 = sadd.s32 %s26, 1
      %s28 = scalar_select %p25, %s26, %s27
      %p31 = pneg %p25
      %p32 = scmp.eq.s32.totalorder %s16, 1
      %p33 = por %p31, %p32
      %p34 = scmp.ne.s32.totalorder %s26, %s29
      %p35 = scmp.eq.s32.totalorder %s16, 0
      %p36 = por %p34, %p35
      %p37 = scmp.ne.s32.totalorder %s26, %s29
      %p38 = scmp.eq.s32.totalorder %s21, 1
      %p39 = por %p37, %p38
      %p40 = scmp.ne.s32.totalorder %s29, %s30
      %p41 = scmp.eq.s32.totalorder %s21, 0
      %p42 = por %p40, %p41
      %p43 = scmp.ne.s32.totalorder %s29, %s30
      %p44 = scmp.eq.s32.totalorder %s22, 1
      %p45 = por %p43, %p44
      %p47 = scmp.ne.s32.totalorder %s30, %s46
      %p48 = scmp.eq.s32.totalorder %s22, 0
      %p49 = por %p47, %p48
      %s50 = ssub.s32 %s16, %s23
      %p51 = scmp.eq.s32.totalorder %s50, 0
      %s53 = sadd.s32 %s52, 1
      %s54 = scalar_select %p51, %s52, %s53
      %p57 = pneg %p51
      %p58 = scmp.eq.s32.totalorder %s16, 1
      %p59 = por %p57, %p58
      %p60 = scmp.ne.s32.totalorder %s52, %s55
      %p61 = scmp.eq.s32.totalorder %s16, 0
      %p62 = por %p60, %p61
      %p63 = scmp.ne.s32.totalorder %s52, %s55
      %p64 = scmp.eq.s32.totalorder %s21, 1
      %p65 = por %p63, %p64
      %p66 = scmp.ne.s32.totalorder %s55, %s56
      %p67 = scmp.eq.s32.totalorder %s21, 0
      %p68 = por %p66, %p67
      %p69 = scmp.ne.s32.totalorder %s55, %s56
      %p70 = scmp.eq.s32.totalorder %s22, 1
      %p71 = por %p69, %p70
      %p73 = scmp.ne.s32.totalorder %s56, %s72
      %p74 = scmp.eq.s32.totalorder %s22, 0
      %p75 = por %p73, %p74
      %s77 = sadd.s32 %s76, 1
      %p80 = scmp.eq.s32.totalorder %s16, 1
      %p81 = scmp.ne.s32.totalorder %s76, %s78
      %p82 = scmp.eq.s32.totalorder %s16, 0
      %p83 = por %p81, %p82
      %p84 = scmp.ne.s32.totalorder %s76, %s78
      %p85 = scmp.eq.s32.totalorder %s21, 1
      %p86 = por %p84, %p85
      %p87 = scmp.ne.s32.totalorder %s78, %s79
      %p88 = scmp.eq.s32.totalorder %s21, 0
      %p89 = por %p87, %p88
      %p90 = scmp.ne.s32.totalorder %s78, %s79
      %p91 = scmp.eq.s32.totalorder %s22, 1
      %p92 = por %p90, %p91
      %p94 = scmp.ne.s32.totalorder %s79, %s93
      %p95 = scmp.eq.s32.totalorder %s22, 0
      %p96 = por %p94, %p95
      %s97 = ssub.s32 %s16, %s23
      %p98 = scmp.eq.s32.totalorder %s97, 0
      %s100 = sadd.s32 %s99, 1
      %s101 = scalar_select %p98, %s99, %s100
      %p104 = pneg %p98
      %p105 = scmp.eq.s32.totalorder %s16, 1
      %p106 = por %p104, %p105
      %p107 = scmp.ne.s32.totalorder %s99, %s102
      %p108 = scmp.eq.s32.totalorder %s16, 0
      %p109 = por %p107, %p108
      %p110 = scmp.ne.s32.totalorder %s99, %s102
      %p111 = scmp.eq.s32.totalorder %s21, 1
      %p112 = por %p110, %p111
      %p113 = scmp.ne.s32.totalorder %s102, %s103
      %p114 = scmp.eq.s32.totalorder %s21, 0
      %p115 = por %p113, %p114
      %p116 = scmp.ne.s32.totalorder %s102, %s103
      %p117 = scmp.eq.s32.totalorder %s22, 1
      %p118 = por %p116, %p117
      %p120 = scmp.ne.s32.totalorder %s103, %s119
      %p121 = scmp.eq.s32.totalorder %s22, 0
      %p122 = por %p120, %p121
      %p123 = scmp.le.s32.totalorder 1, %s16
      %p124 = scmp.lt.s32.totalorder %s16, 3
      %p125 = pnand %p123, %p124
      %p126 = pneg %p125
      // Predicated region
      $region9: #{tpu_custom_call.1} parent=5 // pred_check
        _
      $region10: #{tpu_custom_call.1} parent=5 // pred_check_branch
        %128 = sbr.rel (%p125) target = $region12
      $region11: #{tpu_custom_call.1} parent=5 // pred_region
        %s129 = ssub.s32 %s16, 1
        // Predicated region
        $region13: #{tpu_custom_call.1} parent=11 // pred_check
          %p130 = pneg %p89
        $region14: #{tpu_custom_call.1} parent=11 // pred_check_branch
          %132 = sbr.rel (%p130) target = $region16
        $region15: #{tpu_custom_call.1} parent=11 // pred_region
          _
        $region16: #{tpu_custom_call.1} parent=11 // pred_fallthru
          _
      $region12: #{tpu_custom_call.1} parent=5 // pred_fallthru
        _
      %p133 = scmp.lt.s32.totalorder %s16, 2
      // Predicated region
      $region17: #{tpu_custom_call.1} parent=5 // pred_check
        %p134 = pneg %p133
      $region18: #{tpu_custom_call.1} parent=5 // pred_check_branch
        %136 = sbr.rel (%p134) target = $region20
      $region19: #{tpu_custom_call.1} parent=5 // pred_region
        // Predicated region
        $region21: #{tpu_custom_call.1} parent=19 // pred_check
          %p137 = pneg %p36
        $region22: #{tpu_custom_call.1} parent=19 // pred_check_branch
          %139 = sbr.rel (%p137) target = $region24
        $region23: #{tpu_custom_call.1} parent=19 // pred_region
          %s140 = smul.u32 8, %s16
          %p141 = scmp.lt.s32.totalorder %s140, 15
          %s142 = scalar_select %p141, %s140, 15
          %s143 = smul.addr %s142, 8
          %s144 = scalar_lea.vmem %s2, %s143
          %s145 = smul.u32 8, %s16
        $region24: #{tpu_custom_call.1} parent=19 // pred_fallthru
          _
        // Predicated region
        $region25: #{tpu_custom_call.1} parent=19 // pred_check
          %p146 = pneg %p62
        $region26: #{tpu_custom_call.1} parent=19 // pred_check_branch
          %148 = sbr.rel (%p146) target = $region28
        $region27: #{tpu_custom_call.1} parent=19 // pred_region
          %p149 = scmp.lt.s32.totalorder %s16, 1
          %s150 = scalar_select %p149, %s16, 1
          %s151 = smul.addr %s150, 8
          %s152 = scalar_lea.vmem %s3, %s151
        $region28: #{tpu_custom_call.1} parent=19 // pred_fallthru
          _
      $region20: #{tpu_custom_call.1} parent=5 // pred_fallthru
        _
      %p153 = scmp.le.s32.totalorder 1, %s16
      %p154 = scmp.lt.s32.totalorder %s16, 3
      %p155 = pnand %p153, %p154
      %p156 = pneg %p155
      // Predicated region
      $region29: #{tpu_custom_call.1} parent=5 // pred_check
        _
      $region30: #{tpu_custom_call.1} parent=5 // pred_check_branch
        %158 = sbr.rel (%p155) target = $region32
      $region31: #{tpu_custom_call.1} parent=5 // pred_region
        %s159 = ssub.s32 %s16, 1
        %s160 = smul.u32 8, %s21
        %p161 = scmp.lt.s32.totalorder %s160, 15
        %s162 = scalar_select %p161, %s160, 15
        %s163 = smul.addr %s162, 8
        %s164 = scalar_lea.vmem %s2, %s163
        %p165 = pneg %p42
        %p166 = pneg %p39
        %p167 = scmp.lt.s32.totalorder %s21, 1
        %s168 = scalar_select %p167, %s21, 1
        %s169 = smul.addr %s168, 8
        %s170 = scalar_lea.vmem %s3, %s169
        %p171 = pneg %p68
        %p172 = pneg %p65
        %p173 = pneg %p89
        %p174 = pneg %p86
        %p175 = pneg %p115
        %p176 = pneg %p112
        %s177 = sand.u32 %s102, 1
        %s178 = scalar_lea.sflag [#allocation6], %s177
        %s179 = sand.u32 %s102, 1
        %s180 = smul.addr %s179, 8
        %s181 = scalar_lea.vmem [#allocation5], %s180
        %s182 = smul.u32 8, %s21
        %p183 = scmp.lt.s32.totalorder %s182, 15
        %s184 = scalar_select %p183, %s182, 15
        %s185 = smul.addr %s184, 8
        %s186 = scalar_lea.vmem %s2, %s185
        %s187 = smul.u32 8, %s21
        %p188 = scmp.lt.s32.totalorder %s21, 1
        %s189 = scalar_select %p188, %s21, 1
        %s190 = smul.addr %s189, 8
        %s191 = scalar_lea.vmem %s3, %s190
        %v192 = vld [vmem:[%s186] sm:$0xff]
        %v193 = vld [vmem:[%s186 + $0x8] sm:$0xff]
        %v194 = vld [vmem:[%s186 + $0x10] sm:$0xff]
        %v195 = vld [vmem:[%s186 + $0x18] sm:$0xff]
        %v196 = vld [vmem:[%s186 + $0x20] sm:$0xff]
        %v197 = vld [vmem:[%s186 + $0x28] sm:$0xff]
        %v198 = vld [vmem:[%s186 + $0x30] sm:$0xff]
        %v199 = vld [vmem:[%s186 + $0x38] sm:$0xff]
        %v200 = vld [vmem:[%s191] sm:$0xff]
        %s201 = sld [smem:[#allocation3]]
        %s202 = sld [smem:[#allocation4]]
        %vm203 = vcmp.ne.f32.partialorder %v200, -1.0
        %v204 = vsel %vm203, 1, 0
        %v205 = vcvt.s32.f32 %v204
        %v206 = vld [vmem:[%s4] sm:$0xff]
        %v207 = vld [vmem:[%s4 + $0x8] sm:$0xff]
        %v208 = vld [vmem:[%s4 + $0x10] sm:$0xff]
        %v209 = vld [vmem:[%s4 + $0x18] sm:$0xff]
        %v210 = vld [vmem:[%s4 + $0x20] sm:$0xff]
        %v211 = vld [vmem:[%s4 + $0x28] sm:$0xff]
        %v212 = vld [vmem:[%s4 + $0x30] sm:$0xff]
        %v213 = vld [vmem:[%s4 + $0x38] sm:$0xff]
        %v214 = vld [vmem:[%s4 + $0x40] sm:$0xff]
        %v215 = vld [vmem:[%s4 + $0x48] sm:$0xff]
        %v216 = vld [vmem:[%s4 + $0x50] sm:$0xff]
        %v217 = vld [vmem:[%s4 + $0x58] sm:$0xff]
        %v218 = vld [vmem:[%s4 + $0x60] sm:$0xff]
        %v219 = vld [vmem:[%s4 + $0x68] sm:$0xff]
        %v220 = vld [vmem:[%s4 + $0x70] sm:$0xff]
        %v221 = vld [vmem:[%s4 + $0x78] sm:$0xff]
        %222 = vmatprep.subr.mxu0 0.0
        %223 = vmatpush1.msra.mxu0 %v221
        %224 = vmatprep.subr.mxu0 0.0
        %225 = vmatpush1.msra.mxu0 %v220
        %226 = vmatprep.subr.mxu0 0.0
        %227 = vmatpush1.msra.mxu0 %v219
        %228 = vmatprep.subr.mxu0 0.0
        %229 = vmatpush1.msra.mxu0 %v218
        %230 = vmatprep.subr.mxu0 0.0
        %231 = vmatpush1.msra.mxu0 %v217
        %232 = vmatprep.subr.mxu0 0.0
        %233 = vmatpush1.msra.mxu0 %v216
        %234 = vmatprep.subr.mxu0 0.0
        %235 = vmatpush1.msra.mxu0 %v215
        %236 = vmatprep.subr.mxu0 0.0
        %237 = vmatpush1.msra.mxu0 %v214
        %238 = vmatprep.subr.mxu0 0.0
        %239 = vmatpush1.msra.mxu0 %v213
        %240 = vmatprep.subr.mxu0 0.0
        %241 = vmatpush1.msra.mxu0 %v212
        %242 = vmatprep.subr.mxu0 0.0
        %243 = vmatpush1.msra.mxu0 %v211
        %244 = vmatprep.subr.mxu0 0.0
        %245 = vmatpush1.msra.mxu0 %v210
        %246 = vmatprep.subr.mxu0 0.0
        %247 = vmatpush1.msra.mxu0 %v209
        %248 = vmatprep.subr.mxu0 0.0
        %249 = vmatpush1.msra.mxu0 %v208
        %250 = vmatprep.subr.mxu0 0.0
        %251 = vmatpush1.msra.mxu0 %v207
        %252 = vmatprep.subr.mxu0 0.0
        %253 = vmatpush1.msra.mxu0 %v206
        %254 = vmatprep.subr.mxu0 0.0
        %255 = vmatpush2.msra.mxu0 0.0
        %256 = vmatprep.subr.mxu0 0.0
        %257 = vmatpush2.msra.mxu0 0.0
        %258 = vmatprep.subr.mxu0 0.0
        %259 = vmatpush2.msra.mxu0 0.0
        %260 = vmatprep.subr.mxu0 0.0
        %261 = vmatpush2.msra.mxu0 0.0
        %262 = vmatprep.subr.mxu0 0.0
        %263 = vmatpush2.msra.mxu0 0.0
        %264 = vmatprep.subr.mxu0 0.0
        %265 = vmatpush2.msra.mxu0 0.0
        %266 = vmatprep.subr.mxu0 0.0
        %267 = vmatpush2.msra.mxu0 0.0
        %268 = vmatprep.subr.mxu0 0.0
        %269 = vmatpush2.msra.mxu0 0.0
        %270 = vmatprep.subr.mxu0 0.0
        %271 = vmatpush2.msra.mxu0 0.0
        %272 = vmatprep.subr.mxu0 0.0
        %273 = vmatpush2.msra.mxu0 0.0
        %274 = vmatprep.subr.mxu0 0.0
        %275 = vmatpush2.msra.mxu0 0.0
        %276 = vmatprep.subr.mxu0 0.0
        %277 = vmatpush2.msra.mxu0 0.0
        %278 = vmatprep.subr.mxu0 0.0
        %279 = vmatpush2.msra.mxu0 0.0
        %280 = vmatprep.subr.mxu0 0.0
        %281 = vmatpush2.msra.mxu0 0.0
        %282 = vmatprep.subr.mxu0 0.0
        %283 = vmatpush2.msra.mxu0 0.0
        %284 = vmatprep.subr.mxu0 0.0
        %285 = vmatpush2.msra.mxu0 0.0
        %286 = vmatprep.mubr.f32.mxu0 0.0
        %287 = vmatmul.mubr.f32.gmra.mxu0 %v192
        %v288 = vpop.f32.mrf.mxu0
        %v289 = vadd.f32 0.0, %v288
        %v290 = vpop.f32.mrf.mxu0
        %291 = vmatprep.mubr.f32.mxu0 0.0
        %292 = vmatmul.mubr.f32.gmra.mxu0 %v193
        %v293 = vpop.f32.mrf.mxu0
        %v294 = vadd.f32 0.0, %v293
        %v295 = vpop.f32.mrf.mxu0
        %296 = vmatprep.mubr.f32.mxu0 0.0
        %297 = vmatmul.mubr.f32.gmra.mxu0 %v194
        %v298 = vpop.f32.mrf.mxu0
        %v299 = vadd.f32 0.0, %v298
        %v300 = vpop.f32.mrf.mxu0
        %301 = vmatprep.mubr.f32.mxu0 0.0
        %302 = vmatmul.mubr.f32.gmra.mxu0 %v195
        %v303 = vpop.f32.mrf.mxu0
        %v304 = vadd.f32 0.0, %v303
        %v305 = vpop.f32.mrf.mxu0
        %306 = vmatprep.mubr.f32.mxu0 0.0
        %307 = vmatmul.mubr.f32.gmra.mxu0 %v196
        %v308 = vpop.f32.mrf.mxu0
        %v309 = vadd.f32 0.0, %v308
        %v310 = vpop.f32.mrf.mxu0
        %311 = vmatprep.mubr.f32.mxu0 0.0
        %312 = vmatmul.mubr.f32.gmra.mxu0 %v197
        %v313 = vpop.f32.mrf.mxu0
        %v314 = vadd.f32 0.0, %v313
        %v315 = vpop.f32.mrf.mxu0
        %316 = vmatprep.mubr.f32.mxu0 0.0
        %317 = vmatmul.mubr.f32.gmra.mxu0 %v198
        %v318 = vpop.f32.mrf.mxu0
        %v319 = vadd.f32 0.0, %v318
        %v320 = vpop.f32.mrf.mxu0
        %321 = vmatprep.mubr.f32.mxu0 0.0
        %322 = vmatmul.mubr.f32.gmra.mxu0 %v199
        %v323 = vpop.f32.mrf.mxu0
        %v324 = vadd.f32 0.0, %v323
        %v325 = vpop.f32.mrf.mxu0
        %326 = vdwg.mxu0
        %v327 = vstv %s201
        %v328 = vadd.f32 %v289, %v327
        %v329 = vadd.f32 %v294, %v327
        %v330 = vadd.f32 %v299, %v327
        %v331 = vadd.f32 %v304, %v327
        %v332 = vadd.f32 %v309, %v327
        %v333 = vadd.f32 %v314, %v327
        %v334 = vadd.f32 %v319, %v327
        %v335 = vadd.f32 %v324, %v327
        %344 = vset.pattern.permute.xlu0 0
        %345 = vperm.xlu0 %344, %v328
        %v346 = vpop.permute.xlu0 %345
        %347 = vset.pattern.permute.xlu0 0
        %348 = vperm.xlu0 %347, %v329
        %v349 = vpop.permute.xlu0 %348
        %350 = vset.pattern.permute.xlu0 0
        %351 = vperm.xlu0 %350, %v330
        %v352 = vpop.permute.xlu0 %351
        %353 = vset.pattern.permute.xlu0 0
        %354 = vperm.xlu0 %353, %v331
        %v355 = vpop.permute.xlu0 %354
        %356 = vset.pattern.permute.xlu0 0
        %357 = vperm.xlu0 %356, %v332
        %v358 = vpop.permute.xlu0 %357
        %359 = vset.pattern.permute.xlu0 0
        %360 = vperm.xlu0 %359, %v333
        %v361 = vpop.permute.xlu0 %360
        %362 = vset.pattern.permute.xlu0 0
        %363 = vperm.xlu0 %362, %v334
        %v364 = vpop.permute.xlu0 %363
        %365 = vset.pattern.permute.xlu0 0
        %366 = vperm.xlu0 %365, %v335
        %v367 = vpop.permute.xlu0 %366
        %v368 = vlaneseq
        %v369 = vand.u32 %v368, 127
        %v370 = vlaneseq
        %v371 = vshrl.u32 %v370, 7
        %v372 = vsub.s32 %v369, %v371
        %v373 = vrot.slane %v346, %v372
        %v374 = vlaneseq
        %v375 = vshrl.u32 %v374, 7
        %v376 = vsub.s32 %v369, %v375
        %v377 = vrot.slane %v349, %v376
        %v378 = vlaneseq
        %v379 = vshrl.u32 %v378, 7
        %v380 = vsub.s32 %v369, %v379
        %v381 = vrot.slane %v352, %v380
        %v382 = vlaneseq
        %v383 = vshrl.u32 %v382, 7
        %v384 = vsub.s32 %v369, %v383
        %v385 = vrot.slane %v355, %v384
        %v386 = vlaneseq
        %v387 = vshrl.u32 %v386, 7
        %v388 = vsub.s32 %v369, %v387
        %v389 = vrot.slane %v358, %v388
        %v390 = vlaneseq
        %v391 = vshrl.u32 %v390, 7
        %v392 = vsub.s32 %v369, %v391
        %v393 = vrot.slane %v361, %v392
        %v394 = vlaneseq
        %v395 = vshrl.u32 %v394, 7
        %v396 = vsub.s32 %v369, %v395
        %v397 = vrot.slane %v364, %v396
        %v398 = vlaneseq
        %v399 = vshrl.u32 %v398, 7
        %v400 = vsub.s32 %v369, %v399
        %v401 = vrot.slane %v367, %v400
        %vm402 = vcmask 1041409
        %v403 = vsel %vm402, %v377, %v373
        %vm404 = vcmask 1042434
        %v405 = vsel %vm404, %v381, %v403
        %vm406 = vcmask 1043459
        %v407 = vsel %vm406, %v385, %v405
        %vm408 = vcmask 1044484
        %v409 = vsel %vm408, %v389, %v407
        %vm410 = vcmask 1045509
        %v411 = vsel %vm410, %v393, %v409
        %vm412 = vcmask 1046534
        %v413 = vsel %vm412, %v397, %v411
        %vm414 = vcmask 1047559
        %v415 = vsel %vm414, %v401, %v413
        %vm417 = vcmask 64512
        %v418 = vsel %vm417, %v415, -inf
        %419 = vmax.xlane.f32.xlu0 %v418
        %v420 = vpop.xlane.xlu0 %419
        %v422 = vlaneseq
        %v423 = vshrl.u32 %v422, 7
        %v424 = vsub.s32 0, %v423
        %v425 = vrot.slane %v420, %v424
        %v426 = vlaneseq
        %v427 = vshrl.u32 %v426, 7
        %v428 = vsub.s32 1, %v427
        %v429 = vrot.slane %v420, %v428
        %v430 = vlaneseq
        %v431 = vshrl.u32 %v430, 7
        %v432 = vsub.s32 2, %v431
        %v433 = vrot.slane %v420, %v432
        %v434 = vlaneseq
        %v435 = vshrl.u32 %v434, 7
        %v436 = vsub.s32 3, %v435
        %v437 = vrot.slane %v420, %v436
        %v438 = vlaneseq
        %v439 = vshrl.u32 %v438, 7
        %v440 = vsub.s32 4, %v439
        %v441 = vrot.slane %v420, %v440
        %v442 = vlaneseq
        %v443 = vshrl.u32 %v442, 7
        %v444 = vsub.s32 5, %v443
        %v445 = vrot.slane %v420, %v444
        %v446 = vlaneseq
        %v447 = vshrl.u32 %v446, 7
        %v448 = vsub.s32 6, %v447
        %v449 = vrot.slane %v420, %v448
        %v450 = vlaneseq
        %v451 = vshrl.u32 %v450, 7
        %v452 = vsub.s32 7, %v451
        %v453 = vrot.slane %v420, %v452
        %v462 = vsub.f32 %v328, %v425
        %v463 = vsub.f32 %v329, %v429
        %v464 = vsub.f32 %v330, %v433
        %v465 = vsub.f32 %v331, %v437
        %v466 = vsub.f32 %v332, %v441
        %v467 = vsub.f32 %v333, %v445
        %v468 = vsub.f32 %v334, %v449
        %v469 = vsub.f32 %v335, %v453
        %v470 = vmul.f32 %v462, 1.442695
        %v471 = vpow.pop %v470
        %v472 = vmul.f32 %v463, 1.442695
        %v473 = vpow.pop %v472
        %v474 = vmul.f32 %v464, 1.442695
        %v475 = vpow.pop %v474
        %v476 = vmul.f32 %v465, 1.442695
        %v477 = vpow.pop %v476
        %v478 = vmul.f32 %v466, 1.442695
        %v479 = vpow.pop %v478
        %v480 = vmul.f32 %v467, 1.442695
        %v481 = vpow.pop %v480
        %v482 = vmul.f32 %v468, 1.442695
        %v483 = vpow.pop %v482
        %v484 = vmul.f32 %v469, 1.442695
        %v485 = vpow.pop %v484
        %494 = vset.pattern.permute.xlu0 0
        %495 = vperm.xlu0 %494, %v471
        %v496 = vpop.permute.xlu0 %495
        %497 = vset.pattern.permute.xlu0 0
        %498 = vperm.xlu0 %497, %v473
        %v499 = vpop.permute.xlu0 %498
        %500 = vset.pattern.permute.xlu0 0
        %501 = vperm.xlu0 %500, %v475
        %v502 = vpop.permute.xlu0 %501
        %503 = vset.pattern.permute.xlu0 0
        %504 = vperm.xlu0 %503, %v477
        %v505 = vpop.permute.xlu0 %504
        %506 = vset.pattern.permute.xlu0 0
        %507 = vperm.xlu0 %506, %v479
        %v508 = vpop.permute.xlu0 %507
        %509 = vset.pattern.permute.xlu0 0
        %510 = vperm.xlu0 %509, %v481
        %v511 = vpop.permute.xlu0 %510
        %512 = vset.pattern.permute.xlu0 0
        %513 = vperm.xlu0 %512, %v483
        %v514 = vpop.permute.xlu0 %513
        %515 = vset.pattern.permute.xlu0 0
        %516 = vperm.xlu0 %515, %v485
        %v517 = vpop.permute.xlu0 %516
        %v518 = vlaneseq
        %v519 = vshrl.u32 %v518, 7
        %v520 = vsub.s32 %v369, %v519
        %v521 = vrot.slane %v496, %v520
        %v522 = vlaneseq
        %v523 = vshrl.u32 %v522, 7
        %v524 = vsub.s32 %v369, %v523
        %v525 = vrot.slane %v499, %v524
        %v526 = vlaneseq
        %v527 = vshrl.u32 %v526, 7
        %v528 = vsub.s32 %v369, %v527
        %v529 = vrot.slane %v502, %v528
        %v530 = vlaneseq
        %v531 = vshrl.u32 %v530, 7
        %v532 = vsub.s32 %v369, %v531
        %v533 = vrot.slane %v505, %v532
        %v534 = vlaneseq
        %v535 = vshrl.u32 %v534, 7
        %v536 = vsub.s32 %v369, %v535
        %v537 = vrot.slane %v508, %v536
        %v538 = vlaneseq
        %v539 = vshrl.u32 %v538, 7
        %v540 = vsub.s32 %v369, %v539
        %v541 = vrot.slane %v511, %v540
        %v542 = vlaneseq
        %v543 = vshrl.u32 %v542, 7
        %v544 = vsub.s32 %v369, %v543
        %v545 = vrot.slane %v514, %v544
        %v546 = vlaneseq
        %v547 = vshrl.u32 %v546, 7
        %v548 = vsub.s32 %v369, %v547
        %v549 = vrot.slane %v517, %v548
        %v550 = vsel %vm402, %v525, %v521
        %v551 = vsel %vm404, %v529, %v550
        %v552 = vsel %vm406, %v533, %v551
        %v553 = vsel %vm408, %v537, %v552
        %v554 = vsel %vm410, %v541, %v553
        %v555 = vsel %vm412, %v545, %v554
        %v556 = vsel %vm414, %v549, %v555
        %v558 = vsel %vm417, %v556, 0.0
        %559 = vadd.xlane.f32.xlu0 %v558
        %v560 = vpop.xlane.xlu0 %559
        %v561 = vmax.f32 %v200, 0.0
        %v562 = vsub.f32 0.0, %v561
        %v563 = vstv %s202
        %v564 = vmul.f32 %v562, %v563
        %v565 = vmul.f32 %v564, 1.442695
        %v566 = vpow.pop %v565
        %v568 = vlaneseq
        %v569 = vshrl.u32 %v568, 7
        %v570 = vsub.s32 0, %v569
        %v571 = vrot.slane %v566, %v570
        %573 = vbcast.lane.b32.xlu0 %v571, 256
        %v574 = vpop.permute.xlu0 %573
        %v575 = vlaneseq
        %v576 = vshrl.u32 %v575, 7
        %v577 = vsub.s32 1, %v576
        %v578 = vrot.slane %v566, %v577
        %580 = vbcast.lane.b32.xlu0 %v578, 256
        %v581 = vpop.permute.xlu0 %580
        %v582 = vlaneseq
        %v583 = vshrl.u32 %v582, 7
        %v584 = vsub.s32 2, %v583
        %v585 = vrot.slane %v566, %v584
        %587 = vbcast.lane.b32.xlu0 %v585, 256
        %v588 = vpop.permute.xlu0 %587
        %v589 = vlaneseq
        %v590 = vshrl.u32 %v589, 7
        %v591 = vsub.s32 3, %v590
        %v592 = vrot.slane %v566, %v591
        %594 = vbcast.lane.b32.xlu0 %v592, 256
        %v595 = vpop.permute.xlu0 %594
        %v596 = vlaneseq
        %v597 = vshrl.u32 %v596, 7
        %v598 = vsub.s32 4, %v597
        %v599 = vrot.slane %v566, %v598
        %601 = vbcast.lane.b32.xlu0 %v599, 256
        %v602 = vpop.permute.xlu0 %601
        %v603 = vlaneseq
        %v604 = vshrl.u32 %v603, 7
        %v605 = vsub.s32 5, %v604
        %v606 = vrot.slane %v566, %v605
        %608 = vbcast.lane.b32.xlu0 %v606, 256
        %v609 = vpop.permute.xlu0 %608
        %v610 = vlaneseq
        %v611 = vshrl.u32 %v610, 7
        %v612 = vsub.s32 6, %v611
        %v613 = vrot.slane %v566, %v612
        %615 = vbcast.lane.b32.xlu0 %v613, 256
        %v616 = vpop.permute.xlu0 %615
        %v617 = vlaneseq
        %v618 = vshrl.u32 %v617, 7
        %v619 = vsub.s32 7, %v618
        %v620 = vrot.slane %v566, %v619
        %622 = vbcast.lane.b32.xlu0 %v620, 256
        %v623 = vpop.permute.xlu0 %622
        %v632 = vmul.f32 %v471, %v574
        %v633 = vmul.f32 %v473, %v581
        %v634 = vmul.f32 %v475, %v588
        %v635 = vmul.f32 %v477, %v595
        %v636 = vmul.f32 %v479, %v602
        %v637 = vmul.f32 %v481, %v609
        %v638 = vmul.f32 %v483, %v616
        %v639 = vmul.f32 %v485, %v623
        %v641 = vlaneseq
        %v642 = vshrl.u32 %v641, 7
        %v643 = vsub.s32 0, %v642
        %v644 = vrot.slane %v205, %v643
        %646 = vbcast.lane.b32.xlu0 %v644, 256
        %v647 = vpop.permute.xlu0 %646
        %v648 = vlaneseq
        %v649 = vshrl.u32 %v648, 7
        %v650 = vsub.s32 1, %v649
        %v651 = vrot.slane %v205, %v650
        %653 = vbcast.lane.b32.xlu0 %v651, 256
        %v654 = vpop.permute.xlu0 %653
        %v655 = vlaneseq
        %v656 = vshrl.u32 %v655, 7
        %v657 = vsub.s32 2, %v656
        %v658 = vrot.slane %v205, %v657
        %660 = vbcast.lane.b32.xlu0 %v658, 256
        %v661 = vpop.permute.xlu0 %660
        %v662 = vlaneseq
        %v663 = vshrl.u32 %v662, 7
        %v664 = vsub.s32 3, %v663
        %v665 = vrot.slane %v205, %v664
        %667 = vbcast.lane.b32.xlu0 %v665, 256
        %v668 = vpop.permute.xlu0 %667
        %v669 = vlaneseq
        %v670 = vshrl.u32 %v669, 7
        %v671 = vsub.s32 4, %v670
        %v672 = vrot.slane %v205, %v671
        %674 = vbcast.lane.b32.xlu0 %v672, 256
        %v675 = vpop.permute.xlu0 %674
        %v676 = vlaneseq
        %v677 = vshrl.u32 %v676, 7
        %v678 = vsub.s32 5, %v677
        %v679 = vrot.slane %v205, %v678
        %681 = vbcast.lane.b32.xlu0 %v679, 256
        %v682 = vpop.permute.xlu0 %681
        %v683 = vlaneseq
        %v684 = vshrl.u32 %v683, 7
        %v685 = vsub.s32 6, %v684
        %v686 = vrot.slane %v205, %v685
        %688 = vbcast.lane.b32.xlu0 %v686, 256
        %v689 = vpop.permute.xlu0 %688
        %v690 = vlaneseq
        %v691 = vshrl.u32 %v690, 7
        %v692 = vsub.s32 7, %v691
        %v693 = vrot.slane %v205, %v692
        %695 = vbcast.lane.b32.xlu0 %v693, 256
        %v696 = vpop.permute.xlu0 %695
        %v705 = vmul.f32 %v632, %v647
        %v706 = vmul.f32 %v633, %v654
        %v707 = vmul.f32 %v634, %v661
        %v708 = vmul.f32 %v635, %v668
        %v709 = vmul.f32 %v636, %v675
        %v710 = vmul.f32 %v637, %v682
        %v711 = vmul.f32 %v638, %v689
        %v712 = vmul.f32 %v639, %v696
        %721 = vset.pattern.permute.xlu0 0
        %722 = vperm.xlu0 %721, %v705
        %v723 = vpop.permute.xlu0 %722
        %724 = vset.pattern.permute.xlu0 0
        %725 = vperm.xlu0 %724, %v706
        %v726 = vpop.permute.xlu0 %725
        %727 = vset.pattern.permute.xlu0 0
        %728 = vperm.xlu0 %727, %v707
        %v729 = vpop.permute.xlu0 %728
        %730 = vset.pattern.permute.xlu0 0
        %731 = vperm.xlu0 %730, %v708
        %v732 = vpop.permute.xlu0 %731
        %733 = vset.pattern.permute.xlu0 0
        %734 = vperm.xlu0 %733, %v709
        %v735 = vpop.permute.xlu0 %734
        %736 = vset.pattern.permute.xlu0 0
        %737 = vperm.xlu0 %736, %v710
        %v738 = vpop.permute.xlu0 %737
        %739 = vset.pattern.permute.xlu0 0
        %740 = vperm.xlu0 %739, %v711
        %v741 = vpop.permute.xlu0 %740
        %742 = vset.pattern.permute.xlu0 0
        %743 = vperm.xlu0 %742, %v712
        %v744 = vpop.permute.xlu0 %743
        %v745 = vlaneseq
        %v746 = vshrl.u32 %v745, 7
        %v747 = vsub.s32 %v369, %v746
        %v748 = vrot.slane %v723, %v747
        %v749 = vlaneseq
        %v750 = vshrl.u32 %v749, 7
        %v751 = vsub.s32 %v369, %v750
        %v752 = vrot.slane %v726, %v751
        %v753 = vlaneseq
        %v754 = vshrl.u32 %v753, 7
        %v755 = vsub.s32 %v369, %v754
        %v756 = vrot.slane %v729, %v755
        %v757 = vlaneseq
        %v758 = vshrl.u32 %v757, 7
        %v759 = vsub.s32 %v369, %v758
        %v760 = vrot.slane %v732, %v759
        %v761 = vlaneseq
        %v762 = vshrl.u32 %v761, 7
        %v763 = vsub.s32 %v369, %v762
        %v764 = vrot.slane %v735, %v763
        %v765 = vlaneseq
        %v766 = vshrl.u32 %v765, 7
        %v767 = vsub.s32 %v369, %v766
        %v768 = vrot.slane %v738, %v767
        %v769 = vlaneseq
        %v770 = vshrl.u32 %v769, 7
        %v771 = vsub.s32 %v369, %v770
        %v772 = vrot.slane %v741, %v771
        %v773 = vlaneseq
        %v774 = vshrl.u32 %v773, 7
        %v775 = vsub.s32 %v369, %v774
        %v776 = vrot.slane %v744, %v775
        %v777 = vsel %vm402, %v752, %v748
        %v778 = vsel %vm404, %v756, %v777
        %v779 = vsel %vm406, %v760, %v778
        %v780 = vsel %vm408, %v764, %v779
        %v781 = vsel %vm410, %v768, %v780
        %v782 = vsel %vm412, %v772, %v781
        %v783 = vsel %vm414, %v776, %v782
        %v785 = vsel %vm417, %v783, 0.0
        %786 = vadd.xlane.f32.xlu0 %v785
        %v787 = vpop.xlane.xlu0 %786
        %v788 = vmul.f32 %v560, 1e-08
        %v789 = vmax.f32 %v787, %v788
        %v790 = vrcp.pop %v789
        %v792 = vlaneseq
        %v793 = vshrl.u32 %v792, 7
        %v794 = vsub.s32 0, %v793
        %v795 = vrot.slane %v790, %v794
        %v796 = vlaneseq
        %v797 = vshrl.u32 %v796, 7
        %v798 = vsub.s32 1, %v797
        %v799 = vrot.slane %v790, %v798
        %v800 = vlaneseq
        %v801 = vshrl.u32 %v800, 7
        %v802 = vsub.s32 2, %v801
        %v803 = vrot.slane %v790, %v802
        %v804 = vlaneseq
        %v805 = vshrl.u32 %v804, 7
        %v806 = vsub.s32 3, %v805
        %v807 = vrot.slane %v790, %v806
        %v808 = vlaneseq
        %v809 = vshrl.u32 %v808, 7
        %v810 = vsub.s32 4, %v809
        %v811 = vrot.slane %v790, %v810
        %v812 = vlaneseq
        %v813 = vshrl.u32 %v812, 7
        %v814 = vsub.s32 5, %v813
        %v815 = vrot.slane %v790, %v814
        %v816 = vlaneseq
        %v817 = vshrl.u32 %v816, 7
        %v818 = vsub.s32 6, %v817
        %v819 = vrot.slane %v790, %v818
        %v820 = vlaneseq
        %v821 = vshrl.u32 %v820, 7
        %v822 = vsub.s32 7, %v821
        %v823 = vrot.slane %v790, %v822
        %v832 = vmul.f32 %v705, %v795
        %v833 = vmul.f32 %v706, %v799
        %v834 = vmul.f32 %v707, %v803
        %v835 = vmul.f32 %v708, %v807
        %v836 = vmul.f32 %v709, %v811
        %v837 = vmul.f32 %v710, %v815
        %v838 = vmul.f32 %v711, %v819
        %v839 = vmul.f32 %v712, %v823
        %841 = vset.pattern.permute.xlu0 0
        %842 = vperm.xlu0 %841, %v832
        %v843 = vpop.permute.xlu0 %842
        %v844 = vlaneseq
        %v845 = vshrl.u32 %v844, 7
        %v846 = vsub.s32 %v369, %v845
        %v847 = vrot.slane %v843, %v846
        %v848 = vsel %vm417, %v847, 0
        %850 = vmatprep.subr.mxu0 0.0
        %851 = vmatpush1.msra.mxu0 0.0
        %852 = vmatprep.subr.mxu0 0.0
        %853 = vmatpush1.msra.mxu0 0.0
        %854 = vmatprep.subr.mxu0 0.0
        %855 = vmatpush1.msra.mxu0 0.0
        %856 = vmatprep.subr.mxu0 0.0
        %857 = vmatpush1.msra.mxu0 0.0
        %858 = vmatprep.subr.mxu0 0.0
        %859 = vmatpush1.msra.mxu0 0.0
        %860 = vmatprep.subr.mxu0 0.0
        %861 = vmatpush1.msra.mxu0 0.0
        %862 = vmatprep.subr.mxu0 0.0
        %863 = vmatpush1.msra.mxu0 0.0
        %864 = vmatprep.subr.mxu0 0.0
        %865 = vmatpush1.msra.mxu0 0.0
        %866 = vmatprep.subr.mxu0 0.0
        %867 = vmatpush1.msra.mxu0 0.0
        %868 = vmatprep.subr.mxu0 0.0
        %869 = vmatpush1.msra.mxu0 0.0
        %870 = vmatprep.subr.mxu0 0.0
        %871 = vmatpush1.msra.mxu0 0.0
        %872 = vmatprep.subr.mxu0 0.0
        %873 = vmatpush1.msra.mxu0 0.0
        %874 = vmatprep.subr.mxu0 0.0
        %875 = vmatpush1.msra.mxu0 0.0
        %876 = vmatprep.subr.mxu0 0.0
        %877 = vmatpush1.msra.mxu0 0.0
        %878 = vmatprep.subr.mxu0 0.0
        %879 = vmatpush1.msra.mxu0 0.0
        %880 = vmatprep.subr.mxu0 0.0
        %881 = vmatpush1.msra.mxu0 %v192
        %882 = vmatprep.subr.mxu0 0.0
        %883 = vmatpush2.msra.mxu0 0.0
        %884 = vmatprep.subr.mxu0 0.0
        %885 = vmatpush2.msra.mxu0 0.0
        %886 = vmatprep.subr.mxu0 0.0
        %887 = vmatpush2.msra.mxu0 0.0
        %888 = vmatprep.subr.mxu0 0.0
        %889 = vmatpush2.msra.mxu0 0.0
        %890 = vmatprep.subr.mxu0 0.0
        %891 = vmatpush2.msra.mxu0 0.0
        %892 = vmatprep.subr.mxu0 0.0
        %893 = vmatpush2.msra.mxu0 0.0
        %894 = vmatprep.subr.mxu0 0.0
        %895 = vmatpush2.msra.mxu0 0.0
        %896 = vmatprep.subr.mxu0 0.0
        %897 = vmatpush2.msra.mxu0 0.0
        %898 = vmatprep.subr.mxu0 0.0
        %899 = vmatpush2.msra.mxu0 0.0
        %900 = vmatprep.subr.mxu0 0.0
        %901 = vmatpush2.msra.mxu0 0.0
        %902 = vmatprep.subr.mxu0 0.0
        %903 = vmatpush2.msra.mxu0 0.0
        %904 = vmatprep.subr.mxu0 0.0
        %905 = vmatpush2.msra.mxu0 0.0
        %906 = vmatprep.subr.mxu0 0.0
        %907 = vmatpush2.msra.mxu0 0.0
        %908 = vmatprep.subr.mxu0 0.0
        %909 = vmatpush2.msra.mxu0 0.0
        %910 = vmatprep.subr.mxu0 0.0
        %911 = vmatpush2.msra.mxu0 0.0
        %912 = vmatprep.subr.mxu0 0.0
        %913 = vmatpush2.msra.mxu0 0.0
        %914 = vmatprep.mubr.f32.mxu0 0.0
        %915 = vmatmul.mubr.f32.gmra.mxu0 %v848
        %v916 = vpop.f32.mrf.mxu0
        %v917 = vadd.f32 0.0, %v916
        %v918 = vpop.f32.mrf.mxu0
        %919 = vdwg.mxu0
        %921 = vset.pattern.permute.xlu0 0
        %922 = vperm.xlu0 %921, %v833
        %v923 = vpop.permute.xlu0 %922
        %v924 = vlaneseq
        %v925 = vshrl.u32 %v924, 7
        %v926 = vsub.s32 %v369, %v925
        %v927 = vrot.slane %v923, %v926
        %v928 = vsel %vm417, %v927, 0
        %930 = vmatprep.subr.mxu0 0.0
        %931 = vmatpush1.msra.mxu0 0.0
        %932 = vmatprep.subr.mxu0 0.0
        %933 = vmatpush1.msra.mxu0 0.0
        %934 = vmatprep.subr.mxu0 0.0
        %935 = vmatpush1.msra.mxu0 0.0
        %936 = vmatprep.subr.mxu0 0.0
        %937 = vmatpush1.msra.mxu0 0.0
        %938 = vmatprep.subr.mxu0 0.0
        %939 = vmatpush1.msra.mxu0 0.0
        %940 = vmatprep.subr.mxu0 0.0
        %941 = vmatpush1.msra.mxu0 0.0
        %942 = vmatprep.subr.mxu0 0.0
        %943 = vmatpush1.msra.mxu0 0.0
        %944 = vmatprep.subr.mxu0 0.0
        %945 = vmatpush1.msra.mxu0 0.0
        %946 = vmatprep.subr.mxu0 0.0
        %947 = vmatpush1.msra.mxu0 0.0
        %948 = vmatprep.subr.mxu0 0.0
        %949 = vmatpush1.msra.mxu0 0.0
        %950 = vmatprep.subr.mxu0 0.0
        %951 = vmatpush1.msra.mxu0 0.0
        %952 = vmatprep.subr.mxu0 0.0
        %953 = vmatpush1.msra.mxu0 0.0
        %954 = vmatprep.subr.mxu0 0.0
        %955 = vmatpush1.msra.mxu0 0.0
        %956 = vmatprep.subr.mxu0 0.0
        %957 = vmatpush1.msra.mxu0 0.0
        %958 = vmatprep.subr.mxu0 0.0
        %959 = vmatpush1.msra.mxu0 0.0
        %960 = vmatprep.subr.mxu0 0.0
        %961 = vmatpush1.msra.mxu0 %v193
        %962 = vmatprep.subr.mxu0 0.0
        %963 = vmatpush2.msra.mxu0 0.0
        %964 = vmatprep.subr.mxu0 0.0
        %965 = vmatpush2.msra.mxu0 0.0
        %966 = vmatprep.subr.mxu0 0.0
        %967 = vmatpush2.msra.mxu0 0.0
        %968 = vmatprep.subr.mxu0 0.0
        %969 = vmatpush2.msra.mxu0 0.0
        %970 = vmatprep.subr.mxu0 0.0
        %971 = vmatpush2.msra.mxu0 0.0
        %972 = vmatprep.subr.mxu0 0.0
        %973 = vmatpush2.msra.mxu0 0.0
        %974 = vmatprep.subr.mxu0 0.0
        %975 = vmatpush2.msra.mxu0 0.0
        %976 = vmatprep.subr.mxu0 0.0
        %977 = vmatpush2.msra.mxu0 0.0
        %978 = vmatprep.subr.mxu0 0.0
        %979 = vmatpush2.msra.mxu0 0.0
        %980 = vmatprep.subr.mxu0 0.0
        %981 = vmatpush2.msra.mxu0 0.0
        %982 = vmatprep.subr.mxu0 0.0
        %983 = vmatpush2.msra.mxu0 0.0
        %984 = vmatprep.subr.mxu0 0.0
        %985 = vmatpush2.msra.mxu0 0.0
        %986 = vmatprep.subr.mxu0 0.0
        %987 = vmatpush2.msra.mxu0 0.0
        %988 = vmatprep.subr.mxu0 0.0
        %989 = vmatpush2.msra.mxu0 0.0
        %990 = vmatprep.subr.mxu0 0.0
        %991 = vmatpush2.msra.mxu0 0.0
        %992 = vmatprep.subr.mxu0 0.0
        %993 = vmatpush2.msra.mxu0 0.0
        %994 = vmatprep.mubr.f32.mxu0 0.0
        %995 = vmatmul.mubr.f32.gmra.mxu0 %v928
        %v996 = vpop.f32.mrf.mxu0
        %v997 = vadd.f32 0.0, %v996
        %v998 = vpop.f32.mrf.mxu0
        %999 = vdwg.mxu0
        %1001 = vset.pattern.permute.xlu0 0
        %1002 = vperm.xlu0 %1001, %v834
        %v1003 = vpop.permute.xlu0 %1002
        %v1004 = vlaneseq
        %v1005 = vshrl.u32 %v1004, 7
        %v1006 = vsub.s32 %v369, %v1005
        %v1007 = vrot.slane %v1003, %v1006
        %v1008 = vsel %vm417, %v1007, 0
        %1010 = vmatprep.subr.mxu0 0.0
        %1011 = vmatpush1.msra.mxu0 0.0
        %1012 = vmatprep.subr.mxu0 0.0
        %1013 = vmatpush1.msra.mxu0 0.0
        %1014 = vmatprep.subr.mxu0 0.0
        %1015 = vmatpush1.msra.mxu0 0.0
        %1016 = vmatprep.subr.mxu0 0.0
        %1017 = vmatpush1.msra.mxu0 0.0
        %1018 = vmatprep.subr.mxu0 0.0
        %1019 = vmatpush1.msra.mxu0 0.0
        %1020 = vmatprep.subr.mxu0 0.0
        %1021 = vmatpush1.msra.mxu0 0.0
        %1022 = vmatprep.subr.mxu0 0.0
        %1023 = vmatpush1.msra.mxu0 0.0
        %1024 = vmatprep.subr.mxu0 0.0
        %1025 = vmatpush1.msra.mxu0 0.0
        %1026 = vmatprep.subr.mxu0 0.0
        %1027 = vmatpush1.msra.mxu0 0.0
        %1028 = vmatprep.subr.mxu0 0.0
        %1029 = vmatpush1.msra.mxu0 0.0
        %1030 = vmatprep.subr.mxu0 0.0
        %1031 = vmatpush1.msra.mxu0 0.0
        %1032 = vmatprep.subr.mxu0 0.0
        %1033 = vmatpush1.msra.mxu0 0.0
        %1034 = vmatprep.subr.mxu0 0.0
        %1035 = vmatpush1.msra.mxu0 0.0
        %1036 = vmatprep.subr.mxu0 0.0
        %1037 = vmatpush1.msra.mxu0 0.0
        %1038 = vmatprep.subr.mxu0 0.0
        %1039 = vmatpush1.msra.mxu0 0.0
        %1040 = vmatprep.subr.mxu0 0.0
        %1041 = vmatpush1.msra.mxu0 %v194
        %1042 = vmatprep.subr.mxu0 0.0
        %1043 = vmatpush2.msra.mxu0 0.0
        %1044 = vmatprep.subr.mxu0 0.0
        %1045 = vmatpush2.msra.mxu0 0.0
        %1046 = vmatprep.subr.mxu0 0.0
        %1047 = vmatpush2.msra.mxu0 0.0
        %1048 = vmatprep.subr.mxu0 0.0
        %1049 = vmatpush2.msra.mxu0 0.0
        %1050 = vmatprep.subr.mxu0 0.0
        %1051 = vmatpush2.msra.mxu0 0.0
        %1052 = vmatprep.subr.mxu0 0.0
        %1053 = vmatpush2.msra.mxu0 0.0
        %1054 = vmatprep.subr.mxu0 0.0
        %1055 = vmatpush2.msra.mxu0 0.0
        %1056 = vmatprep.subr.mxu0 0.0
        %1057 = vmatpush2.msra.mxu0 0.0
        %1058 = vmatprep.subr.mxu0 0.0
        %1059 = vmatpush2.msra.mxu0 0.0
        %1060 = vmatprep.subr.mxu0 0.0
        %1061 = vmatpush2.msra.mxu0 0.0
        %1062 = vmatprep.subr.mxu0 0.0
        %1063 = vmatpush2.msra.mxu0 0.0
        %1064 = vmatprep.subr.mxu0 0.0
        %1065 = vmatpush2.msra.mxu0 0.0
        %1066 = vmatprep.subr.mxu0 0.0
        %1067 = vmatpush2.msra.mxu0 0.0
        %1068 = vmatprep.subr.mxu0 0.0
        %1069 = vmatpush2.msra.mxu0 0.0
        %1070 = vmatprep.subr.mxu0 0.0
        %1071 = vmatpush2.msra.mxu0 0.0
        %1072 = vmatprep.subr.mxu0 0.0
        %1073 = vmatpush2.msra.mxu0 0.0
        %1074 = vmatprep.mubr.f32.mxu0 0.0
        %1075 = vmatmul.mubr.f32.gmra.mxu0 %v1008
        %v1076 = vpop.f32.mrf.mxu0
        %v1077 = vadd.f32 0.0, %v1076
        %v1078 = vpop.f32.mrf.mxu0
        %1079 = vdwg.mxu0
        %1081 = vset.pattern.permute.xlu0 0
        %1082 = vperm.xlu0 %1081, %v835
        %v1083 = vpop.permute.xlu0 %1082
        %v1084 = vlaneseq
        %v1085 = vshrl.u32 %v1084, 7
        %v1086 = vsub.s32 %v369, %v1085
        %v1087 = vrot.slane %v1083, %v1086
        %v1088 = vsel %vm417, %v1087, 0
        %1090 = vmatprep.subr.mxu0 0.0
        %1091 = vmatpush1.msra.mxu0 0.0
        %1092 = vmatprep.subr.mxu0 0.0
        %1093 = vmatpush1.msra.mxu0 0.0
        %1094 = vmatprep.subr.mxu0 0.0
        %1095 = vmatpush1.msra.mxu0 0.0
        %1096 = vmatprep.subr.mxu0 0.0
        %1097 = vmatpush1.msra.mxu0 0.0
        %1098 = vmatprep.subr.mxu0 0.0
        %1099 = vmatpush1.msra.mxu0 0.0
        %1100 = vmatprep.subr.mxu0 0.0
        %1101 = vmatpush1.msra.mxu0 0.0
        %1102 = vmatprep.subr.mxu0 0.0
        %1103 = vmatpush1.msra.mxu0 0.0
        %1104 = vmatprep.subr.mxu0 0.0
        %1105 = vmatpush1.msra.mxu0 0.0
        %1106 = vmatprep.subr.mxu0 0.0
        %1107 = vmatpush1.msra.mxu0 0.0
        %1108 = vmatprep.subr.mxu0 0.0
        %1109 = vmatpush1.msra.mxu0 0.0
        %1110 = vmatprep.subr.mxu0 0.0
        %1111 = vmatpush1.msra.mxu0 0.0
        %1112 = vmatprep.subr.mxu0 0.0
        %1113 = vmatpush1.msra.mxu0 0.0
        %1114 = vmatprep.subr.mxu0 0.0
        %1115 = vmatpush1.msra.mxu0 0.0
        %1116 = vmatprep.subr.mxu0 0.0
        %1117 = vmatpush1.msra.mxu0 0.0
        %1118 = vmatprep.subr.mxu0 0.0
        %1119 = vmatpush1.msra.mxu0 0.0
        %1120 = vmatprep.subr.mxu0 0.0
        %1121 = vmatpush1.msra.mxu0 %v195
        %1122 = vmatprep.subr.mxu0 0.0
        %1123 = vmatpush2.msra.mxu0 0.0
        %1124 = vmatprep.subr.mxu0 0.0
        %1125 = vmatpush2.msra.mxu0 0.0
        %1126 = vmatprep.subr.mxu0 0.0
        %1127 = vmatpush2.msra.mxu0 0.0
        %1128 = vmatprep.subr.mxu0 0.0
        %1129 = vmatpush2.msra.mxu0 0.0
        %1130 = vmatprep.subr.mxu0 0.0
        %1131 = vmatpush2.msra.mxu0 0.0
        %1132 = vmatprep.subr.mxu0 0.0
        %1133 = vmatpush2.msra.mxu0 0.0
        %1134 = vmatprep.subr.mxu0 0.0
        %1135 = vmatpush2.msra.mxu0 0.0
        %1136 = vmatprep.subr.mxu0 0.0
        %1137 = vmatpush2.msra.mxu0 0.0
        %1138 = vmatprep.subr.mxu0 0.0
        %1139 = vmatpush2.msra.mxu0 0.0
        %1140 = vmatprep.subr.mxu0 0.0
        %1141 = vmatpush2.msra.mxu0 0.0
        %1142 = vmatprep.subr.mxu0 0.0
        %1143 = vmatpush2.msra.mxu0 0.0
        %1144 = vmatprep.subr.mxu0 0.0
        %1145 = vmatpush2.msra.mxu0 0.0
        %1146 = vmatprep.subr.mxu0 0.0
        %1147 = vmatpush2.msra.mxu0 0.0
        %1148 = vmatprep.subr.mxu0 0.0
        %1149 = vmatpush2.msra.mxu0 0.0
        %1150 = vmatprep.subr.mxu0 0.0
        %1151 = vmatpush2.msra.mxu0 0.0
        %1152 = vmatprep.subr.mxu0 0.0
        %1153 = vmatpush2.msra.mxu0 0.0
        %1154 = vmatprep.mubr.f32.mxu0 0.0
        %1155 = vmatmul.mubr.f32.gmra.mxu0 %v1088
        %v1156 = vpop.f32.mrf.mxu0
        %v1157 = vadd.f32 0.0, %v1156
        %v1158 = vpop.f32.mrf.mxu0
        %1159 = vdwg.mxu0
        %1161 = vset.pattern.permute.xlu0 0
        %1162 = vperm.xlu0 %1161, %v836
        %v1163 = vpop.permute.xlu0 %1162
        %v1164 = vlaneseq
        %v1165 = vshrl.u32 %v1164, 7
        %v1166 = vsub.s32 %v369, %v1165
        %v1167 = vrot.slane %v1163, %v1166
        %v1168 = vsel %vm417, %v1167, 0
        %1170 = vmatprep.subr.mxu0 0.0
        %1171 = vmatpush1.msra.mxu0 0.0
        %1172 = vmatprep.subr.mxu0 0.0
        %1173 = vmatpush1.msra.mxu0 0.0
        %1174 = vmatprep.subr.mxu0 0.0
        %1175 = vmatpush1.msra.mxu0 0.0
        %1176 = vmatprep.subr.mxu0 0.0
        %1177 = vmatpush1.msra.mxu0 0.0
        %1178 = vmatprep.subr.mxu0 0.0
        %1179 = vmatpush1.msra.mxu0 0.0
        %1180 = vmatprep.subr.mxu0 0.0
        %1181 = vmatpush1.msra.mxu0 0.0
        %1182 = vmatprep.subr.mxu0 0.0
        %1183 = vmatpush1.msra.mxu0 0.0
        %1184 = vmatprep.subr.mxu0 0.0
        %1185 = vmatpush1.msra.mxu0 0.0
        %1186 = vmatprep.subr.mxu0 0.0
        %1187 = vmatpush1.msra.mxu0 0.0
        %1188 = vmatprep.subr.mxu0 0.0
        %1189 = vmatpush1.msra.mxu0 0.0
        %1190 = vmatprep.subr.mxu0 0.0
        %1191 = vmatpush1.msra.mxu0 0.0
        %1192 = vmatprep.subr.mxu0 0.0
        %1193 = vmatpush1.msra.mxu0 0.0
        %1194 = vmatprep.subr.mxu0 0.0
        %1195 = vmatpush1.msra.mxu0 0.0
        %1196 = vmatprep.subr.mxu0 0.0
        %1197 = vmatpush1.msra.mxu0 0.0
        %1198 = vmatprep.subr.mxu0 0.0
        %1199 = vmatpush1.msra.mxu0 0.0
        %1200 = vmatprep.subr.mxu0 0.0
        %1201 = vmatpush1.msra.mxu0 %v196
        %1202 = vmatprep.subr.mxu0 0.0
        %1203 = vmatpush2.msra.mxu0 0.0
        %1204 = vmatprep.subr.mxu0 0.0
        %1205 = vmatpush2.msra.mxu0 0.0
        %1206 = vmatprep.subr.mxu0 0.0
        %1207 = vmatpush2.msra.mxu0 0.0
        %1208 = vmatprep.subr.mxu0 0.0
        %1209 = vmatpush2.msra.mxu0 0.0
        %1210 = vmatprep.subr.mxu0 0.0
        %1211 = vmatpush2.msra.mxu0 0.0
        %1212 = vmatprep.subr.mxu0 0.0
        %1213 = vmatpush2.msra.mxu0 0.0
        %1214 = vmatprep.subr.mxu0 0.0
        %1215 = vmatpush2.msra.mxu0 0.0
        %1216 = vmatprep.subr.mxu0 0.0
        %1217 = vmatpush2.msra.mxu0 0.0
        %1218 = vmatprep.subr.mxu0 0.0
        %1219 = vmatpush2.msra.mxu0 0.0
        %1220 = vmatprep.subr.mxu0 0.0
        %1221 = vmatpush2.msra.mxu0 0.0
        %1222 = vmatprep.subr.mxu0 0.0
        %1223 = vmatpush2.msra.mxu0 0.0
        %1224 = vmatprep.subr.mxu0 0.0
        %1225 = vmatpush2.msra.mxu0 0.0
        %1226 = vmatprep.subr.mxu0 0.0
        %1227 = vmatpush2.msra.mxu0 0.0
        %1228 = vmatprep.subr.mxu0 0.0
        %1229 = vmatpush2.msra.mxu0 0.0
        %1230 = vmatprep.subr.mxu0 0.0
        %1231 = vmatpush2.msra.mxu0 0.0
        %1232 = vmatprep.subr.mxu0 0.0
        %1233 = vmatpush2.msra.mxu0 0.0
        %1234 = vmatprep.mubr.f32.mxu0 0.0
        %1235 = vmatmul.mubr.f32.gmra.mxu0 %v1168
        %v1236 = vpop.f32.mrf.mxu0
        %v1237 = vadd.f32 0.0, %v1236
        %v1238 = vpop.f32.mrf.mxu0
        %1239 = vdwg.mxu0
        %1241 = vset.pattern.permute.xlu0 0
        %1242 = vperm.xlu0 %1241, %v837
        %v1243 = vpop.permute.xlu0 %1242
        %v1244 = vlaneseq
        %v1245 = vshrl.u32 %v1244, 7
        %v1246 = vsub.s32 %v369, %v1245
        %v1247 = vrot.slane %v1243, %v1246
        %v1248 = vsel %vm417, %v1247, 0
        %1250 = vmatprep.subr.mxu0 0.0
        %1251 = vmatpush1.msra.mxu0 0.0
        %1252 = vmatprep.subr.mxu0 0.0
        %1253 = vmatpush1.msra.mxu0 0.0
        %1254 = vmatprep.subr.mxu0 0.0
        %1255 = vmatpush1.msra.mxu0 0.0
        %1256 = vmatprep.subr.mxu0 0.0
        %1257 = vmatpush1.msra.mxu0 0.0
        %1258 = vmatprep.subr.mxu0 0.0
        %1259 = vmatpush1.msra.mxu0 0.0
        %1260 = vmatprep.subr.mxu0 0.0
        %1261 = vmatpush1.msra.mxu0 0.0
        %1262 = vmatprep.subr.mxu0 0.0
        %1263 = vmatpush1.msra.mxu0 0.0
        %1264 = vmatprep.subr.mxu0 0.0
        %1265 = vmatpush1.msra.mxu0 0.0
        %1266 = vmatprep.subr.mxu0 0.0
        %1267 = vmatpush1.msra.mxu0 0.0
        %1268 = vmatprep.subr.mxu0 0.0
        %1269 = vmatpush1.msra.mxu0 0.0
        %1270 = vmatprep.subr.mxu0 0.0
        %1271 = vmatpush1.msra.mxu0 0.0
        %1272 = vmatprep.subr.mxu0 0.0
        %1273 = vmatpush1.msra.mxu0 0.0
        %1274 = vmatprep.subr.mxu0 0.0
        %1275 = vmatpush1.msra.mxu0 0.0
        %1276 = vmatprep.subr.mxu0 0.0
        %1277 = vmatpush1.msra.mxu0 0.0
        %1278 = vmatprep.subr.mxu0 0.0
        %1279 = vmatpush1.msra.mxu0 0.0
        %1280 = vmatprep.subr.mxu0 0.0
        %1281 = vmatpush1.msra.mxu0 %v197
        %1282 = vmatprep.subr.mxu0 0.0
        %1283 = vmatpush2.msra.mxu0 0.0
        %1284 = vmatprep.subr.mxu0 0.0
        %1285 = vmatpush2.msra.mxu0 0.0
        %1286 = vmatprep.subr.mxu0 0.0
        %1287 = vmatpush2.msra.mxu0 0.0
        %1288 = vmatprep.subr.mxu0 0.0
        %1289 = vmatpush2.msra.mxu0 0.0
        %1290 = vmatprep.subr.mxu0 0.0
        %1291 = vmatpush2.msra.mxu0 0.0
        %1292 = vmatprep.subr.mxu0 0.0
        %1293 = vmatpush2.msra.mxu0 0.0
        %1294 = vmatprep.subr.mxu0 0.0
        %1295 = vmatpush2.msra.mxu0 0.0
        %1296 = vmatprep.subr.mxu0 0.0
        %1297 = vmatpush2.msra.mxu0 0.0
        %1298 = vmatprep.subr.mxu0 0.0
        %1299 = vmatpush2.msra.mxu0 0.0
        %1300 = vmatprep.subr.mxu0 0.0
        %1301 = vmatpush2.msra.mxu0 0.0
        %1302 = vmatprep.subr.mxu0 0.0
        %1303 = vmatpush2.msra.mxu0 0.0
        %1304 = vmatprep.subr.mxu0 0.0
        %1305 = vmatpush2.msra.mxu0 0.0
        %1306 = vmatprep.subr.mxu0 0.0
        %1307 = vmatpush2.msra.mxu0 0.0
        %1308 = vmatprep.subr.mxu0 0.0
        %1309 = vmatpush2.msra.mxu0 0.0
        %1310 = vmatprep.subr.mxu0 0.0
        %1311 = vmatpush2.msra.mxu0 0.0
        %1312 = vmatprep.subr.mxu0 0.0
        %1313 = vmatpush2.msra.mxu0 0.0
        %1314 = vmatprep.mubr.f32.mxu0 0.0
        %1315 = vmatmul.mubr.f32.gmra.mxu0 %v1248
        %v1316 = vpop.f32.mrf.mxu0
        %v1317 = vadd.f32 0.0, %v1316
        %v1318 = vpop.f32.mrf.mxu0
        %1319 = vdwg.mxu0
        %1321 = vset.pattern.permute.xlu0 0
        %1322 = vperm.xlu0 %1321, %v838
        %v1323 = vpop.permute.xlu0 %1322
        %v1324 = vlaneseq
        %v1325 = vshrl.u32 %v1324, 7
        %v1326 = vsub.s32 %v369, %v1325
        %v1327 = vrot.slane %v1323, %v1326
        %v1328 = vsel %vm417, %v1327, 0
        %1330 = vmatprep.subr.mxu0 0.0
        %1331 = vmatpush1.msra.mxu0 0.0
        %1332 = vmatprep.subr.mxu0 0.0
        %1333 = vmatpush1.msra.mxu0 0.0
        %1334 = vmatprep.subr.mxu0 0.0
        %1335 = vmatpush1.msra.mxu0 0.0
        %1336 = vmatprep.subr.mxu0 0.0
        %1337 = vmatpush1.msra.mxu0 0.0
        %1338 = vmatprep.subr.mxu0 0.0
        %1339 = vmatpush1.msra.mxu0 0.0
        %1340 = vmatprep.subr.mxu0 0.0
        %1341 = vmatpush1.msra.mxu0 0.0
        %1342 = vmatprep.subr.mxu0 0.0
        %1343 = vmatpush1.msra.mxu0 0.0
        %1344 = vmatprep.subr.mxu0 0.0
        %1345 = vmatpush1.msra.mxu0 0.0
        %1346 = vmatprep.subr.mxu0 0.0
        %1347 = vmatpush1.msra.mxu0 0.0
        %1348 = vmatprep.subr.mxu0 0.0
        %1349 = vmatpush1.msra.mxu0 0.0
        %1350 = vmatprep.subr.mxu0 0.0
        %1351 = vmatpush1.msra.mxu0 0.0
        %1352 = vmatprep.subr.mxu0 0.0
        %1353 = vmatpush1.msra.mxu0 0.0
        %1354 = vmatprep.subr.mxu0 0.0
        %1355 = vmatpush1.msra.mxu0 0.0
        %1356 = vmatprep.subr.mxu0 0.0
        %1357 = vmatpush1.msra.mxu0 0.0
        %1358 = vmatprep.subr.mxu0 0.0
        %1359 = vmatpush1.msra.mxu0 0.0
        %1360 = vmatprep.subr.mxu0 0.0
        %1361 = vmatpush1.msra.mxu0 %v198
        %1362 = vmatprep.subr.mxu0 0.0
        %1363 = vmatpush2.msra.mxu0 0.0
        %1364 = vmatprep.subr.mxu0 0.0
        %1365 = vmatpush2.msra.mxu0 0.0
        %1366 = vmatprep.subr.mxu0 0.0
        %1367 = vmatpush2.msra.mxu0 0.0
        %1368 = vmatprep.subr.mxu0 0.0
        %1369 = vmatpush2.msra.mxu0 0.0
        %1370 = vmatprep.subr.mxu0 0.0
        %1371 = vmatpush2.msra.mxu0 0.0
        %1372 = vmatprep.subr.mxu0 0.0
        %1373 = vmatpush2.msra.mxu0 0.0
        %1374 = vmatprep.subr.mxu0 0.0
        %1375 = vmatpush2.msra.mxu0 0.0
        %1376 = vmatprep.subr.mxu0 0.0
        %1377 = vmatpush2.msra.mxu0 0.0
        %1378 = vmatprep.subr.mxu0 0.0
        %1379 = vmatpush2.msra.mxu0 0.0
        %1380 = vmatprep.subr.mxu0 0.0
        %1381 = vmatpush2.msra.mxu0 0.0
        %1382 = vmatprep.subr.mxu0 0.0
        %1383 = vmatpush2.msra.mxu0 0.0
        %1384 = vmatprep.subr.mxu0 0.0
        %1385 = vmatpush2.msra.mxu0 0.0
        %1386 = vmatprep.subr.mxu0 0.0
        %1387 = vmatpush2.msra.mxu0 0.0
        %1388 = vmatprep.subr.mxu0 0.0
        %1389 = vmatpush2.msra.mxu0 0.0
        %1390 = vmatprep.subr.mxu0 0.0
        %1391 = vmatpush2.msra.mxu0 0.0
        %1392 = vmatprep.subr.mxu0 0.0
        %1393 = vmatpush2.msra.mxu0 0.0
        %1394 = vmatprep.mubr.f32.mxu0 0.0
        %1395 = vmatmul.mubr.f32.gmra.mxu0 %v1328
        %v1396 = vpop.f32.mrf.mxu0
        %v1397 = vadd.f32 0.0, %v1396
        %v1398 = vpop.f32.mrf.mxu0
        %1399 = vdwg.mxu0
        %1401 = vset.pattern.permute.xlu0 0
        %1402 = vperm.xlu0 %1401, %v839
        %v1403 = vpop.permute.xlu0 %1402
        %v1404 = vlaneseq
        %v1405 = vshrl.u32 %v1404, 7
        %v1406 = vsub.s32 %v369, %v1405
        %v1407 = vrot.slane %v1403, %v1406
        %v1408 = vsel %vm417, %v1407, 0
        %1410 = vmatprep.subr.mxu0 0.0
        %1411 = vmatpush1.msra.mxu0 0.0
        %1412 = vmatprep.subr.mxu0 0.0
        %1413 = vmatpush1.msra.mxu0 0.0
        %1414 = vmatprep.subr.mxu0 0.0
        %1415 = vmatpush1.msra.mxu0 0.0
        %1416 = vmatprep.subr.mxu0 0.0
        %1417 = vmatpush1.msra.mxu0 0.0
        %1418 = vmatprep.subr.mxu0 0.0
        %1419 = vmatpush1.msra.mxu0 0.0
        %1420 = vmatprep.subr.mxu0 0.0
        %1421 = vmatpush1.msra.mxu0 0.0
        %1422 = vmatprep.subr.mxu0 0.0
        %1423 = vmatpush1.msra.mxu0 0.0
        %1424 = vmatprep.subr.mxu0 0.0
        %1425 = vmatpush1.msra.mxu0 0.0
        %1426 = vmatprep.subr.mxu0 0.0
        %1427 = vmatpush1.msra.mxu0 0.0
        %1428 = vmatprep.subr.mxu0 0.0
        %1429 = vmatpush1.msra.mxu0 0.0
        %1430 = vmatprep.subr.mxu0 0.0
        %1431 = vmatpush1.msra.mxu0 0.0
        %1432 = vmatprep.subr.mxu0 0.0
        %1433 = vmatpush1.msra.mxu0 0.0
        %1434 = vmatprep.subr.mxu0 0.0
        %1435 = vmatpush1.msra.mxu0 0.0
        %1436 = vmatprep.subr.mxu0 0.0
        %1437 = vmatpush1.msra.mxu0 0.0
        %1438 = vmatprep.subr.mxu0 0.0
        %1439 = vmatpush1.msra.mxu0 0.0
        %1440 = vmatprep.subr.mxu0 0.0
        %1441 = vmatpush1.msra.mxu0 %v199
        %1442 = vmatprep.subr.mxu0 0.0
        %1443 = vmatpush2.msra.mxu0 0.0
        %1444 = vmatprep.subr.mxu0 0.0
        %1445 = vmatpush2.msra.mxu0 0.0
        %1446 = vmatprep.subr.mxu0 0.0
        %1447 = vmatpush2.msra.mxu0 0.0
        %1448 = vmatprep.subr.mxu0 0.0
        %1449 = vmatpush2.msra.mxu0 0.0
        %1450 = vmatprep.subr.mxu0 0.0
        %1451 = vmatpush2.msra.mxu0 0.0
        %1452 = vmatprep.subr.mxu0 0.0
        %1453 = vmatpush2.msra.mxu0 0.0
        %1454 = vmatprep.subr.mxu0 0.0
        %1455 = vmatpush2.msra.mxu0 0.0
        %1456 = vmatprep.subr.mxu0 0.0
        %1457 = vmatpush2.msra.mxu0 0.0
        %1458 = vmatprep.subr.mxu0 0.0
        %1459 = vmatpush2.msra.mxu0 0.0
        %1460 = vmatprep.subr.mxu0 0.0
        %1461 = vmatpush2.msra.mxu0 0.0
        %1462 = vmatprep.subr.mxu0 0.0
        %1463 = vmatpush2.msra.mxu0 0.0
        %1464 = vmatprep.subr.mxu0 0.0
        %1465 = vmatpush2.msra.mxu0 0.0
        %1466 = vmatprep.subr.mxu0 0.0
        %1467 = vmatpush2.msra.mxu0 0.0
        %1468 = vmatprep.subr.mxu0 0.0
        %1469 = vmatpush2.msra.mxu0 0.0
        %1470 = vmatprep.subr.mxu0 0.0
        %1471 = vmatpush2.msra.mxu0 0.0
        %1472 = vmatprep.subr.mxu0 0.0
        %1473 = vmatpush2.msra.mxu0 0.0
        %1474 = vmatprep.mubr.f32.mxu0 0.0
        %1475 = vmatmul.mubr.f32.gmra.mxu0 %v1408
        %v1476 = vpop.f32.mrf.mxu0
        %v1477 = vadd.f32 0.0, %v1476
        %v1478 = vpop.f32.mrf.mxu0
        %1479 = vdwg.mxu0
        %v1488 = vrot.slane %v997, 7
        %v1489 = vsel %vm402, %v1488, %v917
        %v1490 = vrot.slane %v1077, 6
        %v1491 = vsel %vm404, %v1490, %v1489
        %v1492 = vrot.slane %v1157, 5
        %v1493 = vsel %vm406, %v1492, %v1491
        %v1494 = vrot.slane %v1237, 4
        %v1495 = vsel %vm408, %v1494, %v1493
        %v1496 = vrot.slane %v1317, 3
        %v1497 = vsel %vm410, %v1496, %v1495
        %v1498 = vrot.slane %v1397, 2
        %v1499 = vsel %vm412, %v1498, %v1497
        %v1500 = vrot.slane %v1477, 1
        %v1501 = vsel %vm414, %v1500, %v1499
        %1503 = vst [vmem:[%s181] sm:$0xff] %v1501
        %s1504 = sand.u32 %s102, 1
        %s1505 = scalar_lea.sflag [#allocation6], %s1504
        %s1506 = sand.u32 %s102, 1
        %s1507 = smul.addr %s1506, 8
        %s1508 = scalar_lea.vmem [#allocation5], %s1507
        // Predicated region
        $region33: #{tpu_custom_call.1} parent=31 // pred_check
          %p1509 = pneg %p112
        $region34: #{tpu_custom_call.1} parent=31 // pred_check_branch
          %1511 = sbr.rel (%p1509) target = $region36
        $region35: #{tpu_custom_call.1} parent=31 // pred_region
          %s1513 = ssub.s32 128, 128
          %1514 = vsyncadd %s1505, %s1513
          %s1515 = smul.addr %s21, 128
          %s1516 = scalar_lea.hbm %s5, %s1515
          %s1518 = sshll.u32 %s1508, 4
          %s1519 = int_to_ptr.vmem [resolvable:$true] %s1518
          %1521 = dma.vmem_to_hbm [thread:$0]  %s1519, 128, %s1516, %s1505
        $region36: #{tpu_custom_call.1} parent=31 // pred_fallthru
          _
      $region32: #{tpu_custom_call.1} parent=5 // pred_fallthru
        _
      %p1522 = scmp.le.s32.totalorder 2, %s16
      // Predicated region
      $region37: #{tpu_custom_call.1} parent=5 // pred_check
        %p1523 = pneg %p1522
      $region38: #{tpu_custom_call.1} parent=5 // pred_check_branch
        %1525 = sbr.rel (%p1523) target = $region40
      $region39: #{tpu_custom_call.1} parent=5 // pred_region
        %s1526 = ssub.s32 %s16, 2
        // Predicated region
        $region41: #{tpu_custom_call.1} parent=39 // pred_check
          %p1527 = pneg %p118
        $region42: #{tpu_custom_call.1} parent=39 // pred_check_branch
          %1529 = sbr.rel (%p1527) target = $region44
        $region43: #{tpu_custom_call.1} parent=39 // pred_region
          %s1530 = sand.u32 %s103, 1
          %s1531 = scalar_lea.sflag [#allocation6], %s1530
          %s1532 = sand.u32 %s103, 1
          %s1533 = smul.addr %s1532, 8
          %s1534 = scalar_lea.vmem [#allocation5], %s1533
          %1535 = dma.done %s1531, 128
        $region44: #{tpu_custom_call.1} parent=39 // pred_fallthru
          _
      $region40: #{tpu_custom_call.1} parent=5 // pred_fallthru
        _
    $region6: #{tpu_custom_call.1} parent=1 // loop_footer
      %s20 = sadd.s32 1, %s16
    $region7: #{tpu_custom_call.1} parent=1 // loop_footer_branch
      %15 = sbr.rel target = $region3
    $region8: #{tpu_custom_call.1} parent=1 // loop_exit
      _
    %1536 = vsyncpa [#allocation6], 1
    %s1537 = scalar_lea.sflag [#allocation6], 1
    %1538 = vsyncpa %s1537, 1

</llo_original>
